<compile_context>
chip_gen: v6e
topology: v6e:2x2x1
jax: 0.10.0
libtpu: 0.0.40
codegen_flags: <defaults>
</compile_context>

<pallas_src>
import functools

import jax
import jax.numpy as jnp
from jax.experimental import pallas as pl
from jax.experimental.pallas import tpu as pltpu


_INV_SQRT2 = 0.7071067811865476
_SQRT_2_OVER_PI = 0.7978845608028654

_VMEM_TILE_BUDGET_BYTES = 20 * 1024 * 1024  # conservative; fits v5e/v6e/v7x


def _make_channel_mixer_kernel(approximate_gelu):
    def kernel(x_ref, w1_ref, b1_ref, w2_ref, b2_ref, o_ref):
        # x_ref : (tm, D) f32    w1_ref: (D, H) bf16   b1_ref: (1, H) f32
        # w2_ref: (H, D) bf16    b2_ref: (1, D) f32    o_ref : (tm, D)
        x_f32 = x_ref[...]                     # keep f32 copy for the residual
        x_bf = x_f32.astype(jnp.bfloat16)      # bf16 operand for the MXU

        # fc1 (bf16 x bf16 -> f32 accumulate)
        h = jnp.dot(x_bf, w1_ref[...], preferred_element_type=jnp.float32)
        h = h + b1_ref[...]

        if approximate_gelu:
            # tanh GELU: EUP path (numerics-visible change vs torch default)
            h = 0.5 * h * (1.0 + jnp.tanh(_SQRT_2_OVER_PI
                                          * (h + 0.044715 * h * h * h)))
        else:
            # exact erf GELU, matching torch.nn.functional.gelu default
            h = 0.5 * h * (1.0 + jax.lax.erf(h * _INV_SQRT2))
        # dropout1: identity at inference

        # fc2 (bf16 x bf16 -> f32 accumulate)
        y = jnp.dot(h.astype(jnp.bfloat16), w2_ref[...],
                    preferred_element_type=jnp.float32)
        y = y + b2_ref[...]
        # dropout2: identity at inference

        # residual (flat layout; equivalent to adding the NCHW residual after
        # un-permuting, since the permutation is a bijection)
        o_ref[...] = (y + x_f32).astype(o_ref.dtype)

    return kernel


def _round_up(x, m):
    return (x + m - 1) // m * m


def _per_row_vmem_bytes(D, H, out_itemsize):
    """Approximate VMEM bytes per tile row (pipelined buffers + intermediates)."""
    return (2 * D * 4                 # x tile, f32, double-buffered
            + 2 * D * out_itemsize    # out tile, double-buffered
            + D * 2 + H * 2           # bf16 copies fed to the MXU
            + H * 4 + D * 4)          # f32 h / y intermediates


def _fixed_vmem_bytes(D, H):
    """Weights (bf16, double-buffered by default) + biases."""
    return 2 * (D * H * 2 + H * D * 2) + 2 * (H * 4 + D * 4)


def _pick_tile_rows(rows, D, H, out_itemsize):
    if rows <= 8:
        return rows                       # one block covering the full row dim
    r8_floor = (rows // 8) * 8            # largest multiple of 8 <= rows
    cap = ((_VMEM_TILE_BUDGET_BYTES - _fixed_vmem_bytes(D, H))
           // _per_row_vmem_bytes(D, H, out_itemsize))
    cap = max(8, (cap // 8) * 8)
    if rows <= 256:
        # Tiny problem: one grid step (plus a ragged tail if rows % 8 != 0);
        # per-step overhead would dominate and megacore sharding buys nothing.
        t = r8_floor
    else:
        # Large problem: prefer big tiles but keep >=4 grid steps so v7x's two
        # TensorCores each get >=2 pipelined iterations (v5e/v6e: >=3 steps
        # gives the same prefetch/writeback overlap).
        t = 128
        for cand in (512, 256):
            if cand <= cap and pl.cdiv(rows, cand) >= 4:
                t = cand
                break
    return max(8, min(t, cap, r8_floor))


def channel_mixer_forward_flat(xf, w1, b1, w2, b2, *, tile_rows=None,
                               out_dtype=None, approximate_gelu=False):
    """Flat-layout entry point.

    xf: (rows, D) = (B*segments_nr, sensor_channel*num_features) float32.
    Use this directly when chaining mixer layers so the NCHW<->flat transposes
    never cross HBM between layers.  Pass out_dtype=jnp.bfloat16 to halve the
    output HBM traffic when downstream layers accept bf16 activations.
    """
    rows, D = xf.shape
    H = w1.shape[1]
    if out_dtype is None:
        out_dtype = xf.dtype
    out_itemsize = jnp.dtype(out_dtype).itemsize

    # TODO(synk): if D is not a multiple of 128 (lane-sparse output stores,
    # worst on v5e), pad the flat feature axis to the next multiple of 128 and
    # zero-pad W1 rows / W2 cols accordingly.

    if tile_rows is None:
        tile_rows = _pick_tile_rows(rows, D, H, out_itemsize)
    if rows >= 8:
        tile_rows = max(8, min(_round_up(int(tile_rows), 8), (rows // 8) * 8))
    else:
        tile_rows = rows

    # Ragged last block instead of pad + slice (each of those is a full HBM
    # pass on a bandwidth-bound kernel).
    grid = (pl.cdiv(rows, tile_rows),)

    b1_2d = b1.reshape(1, H).astype(jnp.float32)
    b2_2d = b2.reshape(1, D).astype(jnp.float32)
    w1_bf = w1.astype(jnp.bfloat16)
    w2_bf = w2.astype(jnp.bfloat16)

    # Weights/biases have a constant index_map, so they are DMA'd once; the
    # default double-buffering only wastes a second VMEM buffer.  Single-buffer
    # them when they are big enough for that to matter (keeps small/typical
    # configs on the maximally-vanilla code path).
    weight_kwargs = {}
    if 2 * (D * H * 2) >= (4 << 20):
        weight_kwargs = dict(pipeline_mode=pl.Buffered(1))

    footprint = (_fixed_vmem_bytes(D, H)
                 + tile_rows * _per_row_vmem_bytes(D, H, out_itemsize))
    # Explicit, generation-aware budget: stay well under v7x's 64 MiB physical
    # VMEM while deliberately raising v5e's 16 MiB default scoped limit.
    vmem_limit_bytes = int(min(44 << 20, max(24 << 20, 2 * footprint)))

    cost = pl.CostEstimate(
        flops=4 * rows * D * H,                    # two matmuls
        transcendentals=rows * H,                  # gelu (advisory only)
        bytes_accessed=(rows * D * (4 + out_itemsize)  # x in + out
                        + 2 * D * H * 2                # W1, W2 (bf16)
                        + (H + D) * 4),                # biases
    )

    out_flat = pl.pallas_call(
        _make_channel_mixer_kernel(approximate_gelu),
        out_shape=jax.ShapeDtypeStruct((rows, D), out_dtype),
        grid_spec=pltpu.PrefetchScalarGridSpec(
            num_scalar_prefetch=0,
            grid=grid,
            in_specs=[
                pl.BlockSpec((tile_rows, D), lambda i: (i, 0)),   # x tile
                pl.BlockSpec((D, H), lambda i: (0, 0), **weight_kwargs),  # W1
                pl.BlockSpec((1, H), lambda i: (0, 0)),                   # b1
                pl.BlockSpec((H, D), lambda i: (0, 0), **weight_kwargs),  # W2
                pl.BlockSpec((1, D), lambda i: (0, 0)),                   # b2
            ],
            out_specs=pl.BlockSpec((tile_rows, D), lambda i: (i, 0)),
        ),
        compiler_params=pltpu.CompilerParams(
            dimension_semantics=("parallel",),
            vmem_limit_bytes=vmem_limit_bytes),
        cost_estimate=cost,
    )(xf, w1_bf, b1_2d, w2_bf, b2_2d)

    return out_flat


def channel_mixer_forward(x, w1, b1, w2, b2, *,
                          num_features, segments_nr, sensor_channel,
                          tile_rows=None, approximate_gelu=False):
    """x: (B, num_features, segments_nr, sensor_channel) float32 (NCHW path)."""
    B = x.shape[0]
    D = num_features * sensor_channel
    rows = B * segments_nr

    # (B, F, S, C) -> (B, S, C, F) -> (B*S, C*F)   [matches torch permute+reshape]
    # TODO(synk): fuse this permutation into the kernel (read native (B,F,S,C)
    # blocks and relayout in VMEM) or keep activations in the flat layout
    # across adjacent mixer layers via channel_mixer_forward_flat; each XLA
    # transpose here is an extra full HBM pass on a bandwidth-bound kernel.
    xf = jnp.transpose(x, (0, 2, 3, 1)).reshape(rows, D)

    out_flat = channel_mixer_forward_flat(xf, w1, b1, w2, b2,
                                          tile_rows=tile_rows,
                                          out_dtype=x.dtype,
                                          approximate_gelu=approximate_gelu)

    # (B*S, C*F) -> (B, S, C, F) -> (B, F, S, C)
    out = out_flat.reshape(B, segments_nr, sensor_channel, num_features)
    return jnp.transpose(out, (0, 3, 1, 2))


def _torch_linear_init(key, fan_in, fan_out, dtype=jnp.float32):
    """Deterministic init mimicking torch.nn.Linear (uniform +/- 1/sqrt(fan_in))."""
    kw, kb = jax.random.split(key)
    bound = 1.0 / jnp.sqrt(jnp.asarray(fan_in, dtype))
    w = jax.random.uniform(kw, (fan_in, fan_out), dtype, -bound, bound)
    b = jax.random.uniform(kb, (1, fan_out), dtype, -bound, bound)
    return w, b


def _reference_forward(x, w1, b1, w2, b2, *, num_features, segments_nr,
                       sensor_channel):
    """Pure-JAX f32 reference mirroring the PyTorch module."""
    B = x.shape[0]
    D = num_features * sensor_channel
    xf = jnp.transpose(x, (0, 2, 3, 1)).reshape(B, segments_nr, D)
    h = jax.nn.gelu(xf @ w1 + b1[0], approximate=False)
    y = h @ w2 + b2[0]
    y = y.reshape(B, segments_nr, sensor_channel, num_features)
    y = jnp.transpose(y, (0, 3, 1, 2))
    return y + x


def _run_config(key, B, num_features, segments_nr, sensor_channel,
                expansion_factor):
    D = num_features * sensor_channel
    H = D * expansion_factor
    kx, k1, k2 = jax.random.split(key, 3)
    x = jax.random.normal(kx, (B, num_features, segments_nr, sensor_channel),
                          dtype=jnp.float32)
    w1, b1 = _torch_linear_init(k1, D, H)   # fc1: D -> H
    w2, b2 = _torch_linear_init(k2, H, D)   # fc2: H -> D

    fwd = functools.partial(channel_mixer_forward,
                            num_features=num_features,
                            segments_nr=segments_nr,
                            sensor_channel=sensor_channel)
    out = jax.jit(fwd)(x, w1, b1, w2, b2)
    out = jax.block_until_ready(out)

    ref = _reference_forward(x, w1, b1, w2, b2,
                             num_features=num_features,
                             segments_nr=segments_nr,
                             sensor_channel=sensor_channel)
    assert out.shape == x.shape
    # bf16 MXU operands (f32 accumulate) => relaxed tolerance vs the f32 ref.
    assert jnp.allclose(out, ref, atol=2e-2, rtol=2e-2), "mismatch vs reference"


if __name__ == "__main__":
    key = jax.random.PRNGKey(0)
    k_a, k_b = jax.random.split(key)

    # Config A: num_features=16, segments_nr=8, sensor_channel=8,
    # expansion_factor=2 => D=128, H=256, x: (2, 16, 8, 8); rows=16 -> 1 step.
    _run_config(k_a, B=2, num_features=16, segments_nr=8, sensor_channel=8,
                expansion_factor=2)

    # Config B: rows=15 (not a multiple of the tile) exercises the
    # ragged-last-block path (no pad, no slice).
    _run_config(k_b, B=3, num_features=16, segments_nr=5, sensor_channel=8,
                expansion_factor=2)

    print("KERNEL_OK")
</pallas_src>

<mosaic_0001>
module attributes {stable_mosaic.version = 11 : i64} {
  func.func @kernel(%arg0: i32, %arg1: memref<16x128xf32, #tpu.memory_space<vmem>>, %arg2: memref<128x256xbf16, #tpu.memory_space<vmem>>, %arg3: memref<1x256xf32, #tpu.memory_space<vmem>>, %arg4: memref<256x128xbf16, #tpu.memory_space<vmem>>, %arg5: memref<1x128xf32, #tpu.memory_space<vmem>>, %arg6: memref<16x128xf32, #tpu.memory_space<vmem>>) attributes {dimension_semantics = [#tpu.dimension_semantics<parallel>], iteration_bounds = array<i64: 1>, scalar_prefetch = 0 : i64, scratch_operands = 0 : i64, tpu.core_type = #tpu.core_type<tc>, window_params = [{transform_indices = @transform_0, window_bounds = array<i64: 16, 128>}, {pipeline_mode = #tpu.pipeline_mode<synchronous>, transform_indices = @transform_1, window_bounds = array<i64: 128, 256>}, {pipeline_mode = #tpu.pipeline_mode<synchronous>, transform_indices = @transform_2, window_bounds = array<i64: 1, 256>}, {pipeline_mode = #tpu.pipeline_mode<synchronous>, transform_indices = @transform_3, window_bounds = array<i64: 256, 128>}, {pipeline_mode = #tpu.pipeline_mode<synchronous>, transform_indices = @transform_4, window_bounds = array<i64: 1, 128>}, {transform_indices = @transform_5, window_bounds = array<i64: 16, 128>}]} {
    %c0 = arith.constant 0 : index
    %c0_0 = arith.constant 0 : index
    %0 = vector.load %arg1[%c0, %c0_0] : memref<16x128xf32, #tpu.memory_space<vmem>>, vector<16x128xf32>
    %1 = arith.truncf %0 : vector<16x128xf32> to vector<16x128xbf16>
    %c0_1 = arith.constant 0 : index
    %c0_2 = arith.constant 0 : index
    %2 = vector.load %arg2[%c0_1, %c0_2] : memref<128x256xbf16, #tpu.memory_space<vmem>>, vector<128x256xbf16>
    %cst = arith.constant dense<0.000000e+00> : vector<16x256xf32>
    %3 = tpu.matmul %1, %2, %cst {dimension_numbers = #tpu.dot_dimension_numbers<[1], [0], [0], [1], [0, 0, 1, 1], [], []>} : vector<16x128xbf16>, vector<128x256xbf16>, vector<16x256xf32> -> vector<16x256xf32>
    %c0_3 = arith.constant 0 : index
    %c0_4 = arith.constant 0 : index
    %4 = vector.load %arg3[%c0_3, %c0_4] : memref<1x256xf32, #tpu.memory_space<vmem>>, vector<1x256xf32>
    %5 = vector.broadcast %4 : vector<1x256xf32> to vector<16x256xf32>
    %6 = arith.addf %3, %5 : vector<16x256xf32>
    %cst_5 = arith.constant 5.000000e-01 : f32
    %7 = vector.broadcast %cst_5 : f32 to vector<16x256xf32>
    %8 = arith.mulf %7, %6 : vector<16x256xf32>
    %cst_6 = arith.constant 0.707106769 : f32
    %9 = vector.broadcast %cst_6 : f32 to vector<16x256xf32>
    %10 = arith.mulf %6, %9 : vector<16x256xf32>
    %11 = math.erf %10 : vector<16x256xf32>
    %cst_7 = arith.constant 1.000000e+00 : f32
    %12 = vector.broadcast %cst_7 : f32 to vector<16x256xf32>
    %13 = arith.addf %12, %11 : vector<16x256xf32>
    %14 = arith.mulf %8, %13 : vector<16x256xf32>
    %15 = arith.truncf %14 : vector<16x256xf32> to vector<16x256xbf16>
    %c0_8 = arith.constant 0 : index
    %c0_9 = arith.constant 0 : index
    %16 = vector.load %arg4[%c0_8, %c0_9] : memref<256x128xbf16, #tpu.memory_space<vmem>>, vector<256x128xbf16>
    %cst_10 = arith.constant dense<0.000000e+00> : vector<16x128xf32>
    %17 = tpu.matmul %15, %16, %cst_10 {dimension_numbers = #tpu.dot_dimension_numbers<[1], [0], [0], [1], [0, 0, 1, 1], [], []>} : vector<16x256xbf16>, vector<256x128xbf16>, vector<16x128xf32> -> vector<16x128xf32>
    %c0_11 = arith.constant 0 : index
    %c0_12 = arith.constant 0 : index
    %18 = vector.load %arg5[%c0_11, %c0_12] : memref<1x128xf32, #tpu.memory_space<vmem>>, vector<1x128xf32>
    %19 = vector.broadcast %18 : vector<1x128xf32> to vector<16x128xf32>
    %20 = arith.addf %17, %19 : vector<16x128xf32>
    %21 = arith.addf %20, %0 : vector<16x128xf32>
    %c0_13 = arith.constant 0 : index
    %c0_14 = arith.constant 0 : index
    %22 = vector.load %arg6[%c0_13, %c0_14] : memref<16x128xf32, #tpu.memory_space<vmem>>, vector<16x128xf32>
    tpu.vector_store %arg6[%c0_13, %c0_14], %21 {strides = array<i32>} : memref<16x128xf32, #tpu.memory_space<vmem>>, vector<16x128xf32>,
    return
  }
  func.func @transform_0(%arg0: i32) -> (i32, i32) {
    %c0_i32 = arith.constant 0 : i32
    %c0_i32_0 = arith.constant 0 : i32
    return %arg0, %c0_i32 : i32, i32
  }
  func.func @transform_1(%arg0: i32) -> (i32, i32) {
    %c0_i32 = arith.constant 0 : i32
    %c0_i32_0 = arith.constant 0 : i32
    %c0_i32_1 = arith.constant 0 : i32
    return %c0_i32, %c0_i32_0 : i32, i32
  }
  func.func @transform_2(%arg0: i32) -> (i32, i32) {
    %c0_i32 = arith.constant 0 : i32
    %c0_i32_0 = arith.constant 0 : i32
    %c0_i32_1 = arith.constant 0 : i32
    return %c0_i32, %c0_i32_0 : i32, i32
  }
  func.func @transform_3(%arg0: i32) -> (i32, i32) {
    %c0_i32 = arith.constant 0 : i32
    %c0_i32_0 = arith.constant 0 : i32
    %c0_i32_1 = arith.constant 0 : i32
    return %c0_i32, %c0_i32_0 : i32, i32
  }
  func.func @transform_4(%arg0: i32) -> (i32, i32) {
    %c0_i32 = arith.constant 0 : i32
    %c0_i32_0 = arith.constant 0 : i32
    %c0_i32_1 = arith.constant 0 : i32
    return %c0_i32, %c0_i32_0 : i32, i32
  }
  func.func @transform_5(%arg0: i32) -> (i32, i32) {
    %c0_i32 = arith.constant 0 : i32
    %c0_i32_0 = arith.constant 0 : i32
    return %arg0, %c0_i32 : i32, i32
  }
}

</mosaic_0001>

<llo_original>
// kernel: channel_mixer_forward.1
$region0: #{channel_mixer_forward.1}
  #allocation0 [shape = 'u32[]', space=smem, size = 0x4, offset = 0x4, fixed_abs, tag = 'smem constant byte address 0x4 - core index']
  #allocation1 [shape = 'u32[144,128]{1,0:T(1,128)}', space=vmem, size = 0x12000, scoped, tag = 'internal scratch']
  %s0 = inlined_call_operand.vmem [shape: f32[16,128], index: 0, kind: input, shape index: {}]
  %s1 = inlined_call_operand.vmem [shape: bf16[128,256], index: 1, kind: input, shape index: {}]
  %s2 = inlined_call_operand.vmem [shape: f32[1,256], index: 2, kind: input, shape index: {}]
  %s3 = inlined_call_operand.vmem [shape: bf16[256,128], index: 3, kind: input, shape index: {}]
  %s4 = inlined_call_operand.vmem [shape: f32[1,128], index: 4, kind: input, shape index: {}]
  %s5 = inlined_call_operand.vmem [shape: f32[16,128], index: 5, kind: output, shape index: {}]
  %s6 = sld [smem:[#allocation0]]
  $region30: #{channel_mixer_forward.1} parent=0
    _
  %s8 = ssub.s32 1, %s6
  %s9 = scalar_select 0, %s8, %s6
  // Predicated region
  $region2: #{channel_mixer_forward.1} parent=0 // pred_check
    _
  $region3: #{channel_mixer_forward.1} parent=0 // pred_check_branch
    %11 = sbr.rel (0) target = $region5
  $region4: #{channel_mixer_forward.1} parent=0 // pred_region
    _
  $region5: #{channel_mixer_forward.1} parent=0 // pred_fallthru
    _
  // Predicated region
  $region6: #{channel_mixer_forward.1} parent=0 // pred_check
    _
  $region7: #{channel_mixer_forward.1} parent=0 // pred_check_branch
    %13 = sbr.rel (0) target = $region9
  $region8: #{channel_mixer_forward.1} parent=0 // pred_region
    _
  $region9: #{channel_mixer_forward.1} parent=0 // pred_fallthru
    _
  // Predicated region
  $region10: #{channel_mixer_forward.1} parent=0 // pred_check
    _
  $region11: #{channel_mixer_forward.1} parent=0 // pred_check_branch
    %15 = sbr.rel (0) target = $region13
  $region12: #{channel_mixer_forward.1} parent=0 // pred_region
    _
  $region13: #{channel_mixer_forward.1} parent=0 // pred_fallthru
    _
  // Predicated region
  $region14: #{channel_mixer_forward.1} parent=0 // pred_check
    _
  $region15: #{channel_mixer_forward.1} parent=0 // pred_check_branch
    %17 = sbr.rel (0) target = $region17
  $region16: #{channel_mixer_forward.1} parent=0 // pred_region
    _
  $region17: #{channel_mixer_forward.1} parent=0 // pred_fallthru
    _
  // Predicated region
  $region18: #{channel_mixer_forward.1} parent=0 // pred_check
    _
  $region19: #{channel_mixer_forward.1} parent=0 // pred_check_branch
    %19 = sbr.rel (0) target = $region21
  $region20: #{channel_mixer_forward.1} parent=0 // pred_region
    _
  $region21: #{channel_mixer_forward.1} parent=0 // pred_fallthru
    _
  %v21 = vld [vmem:[%s0] sm:$0xff]
  %v22 = vld [vmem:[%s0 + $0x8] sm:$0xff]
  %v23 = vpack.c.bf16 %v22, %v21
  %v24 = vld [vmem:[%s1] sm:$0xff]
  %v25 = vld [vmem:[%s1 + $0x8] sm:$0xff]
  %v26 = vld [vmem:[%s1 + $0x10] sm:$0xff]
  %v27 = vld [vmem:[%s1 + $0x18] sm:$0xff]
  %v28 = vld [vmem:[%s1 + $0x20] sm:$0xff]
  %v29 = vld [vmem:[%s1 + $0x28] sm:$0xff]
  %v30 = vld [vmem:[%s1 + $0x30] sm:$0xff]
  %v31 = vld [vmem:[%s1 + $0x38] sm:$0xff]
  %v32 = vld [vmem:[%s1 + $0x40] sm:$0xff]
  %v33 = vld [vmem:[%s1 + $0x48] sm:$0xff]
  %v34 = vld [vmem:[%s1 + $0x50] sm:$0xff]
  %v35 = vld [vmem:[%s1 + $0x58] sm:$0xff]
  %v36 = vld [vmem:[%s1 + $0x60] sm:$0xff]
  %v37 = vld [vmem:[%s1 + $0x68] sm:$0xff]
  %v38 = vld [vmem:[%s1 + $0x70] sm:$0xff]
  %v39 = vld [vmem:[%s1 + $0x78] sm:$0xff]
  %v40 = vld [vmem:[%s2] sm:$0x3]
  %v42 = vlaneseq
  %v43 = vshrl.u32 %v42, 7
  %v44 = vsub.s32 0, %v43
  %v45 = vrot.slane %v40, %v44
  %v46 = vlaneseq
  %v47 = vshrl.u32 %v46, 7
  %v48 = vsub.s32 1, %v47
  %v49 = vrot.slane %v40, %v48
  %v68 = vunpack.c.l.b16 %v24
  %v69 = vunpack.c.h.b16 %v24
  %v70 = vunpack.c.l.b16 %v25
  %v71 = vunpack.c.h.b16 %v25
  %v72 = vunpack.c.l.b16 %v26
  %v73 = vunpack.c.h.b16 %v26
  %v74 = vunpack.c.l.b16 %v27
  %v75 = vunpack.c.h.b16 %v27
  %v76 = vunpack.c.l.b16 %v28
  %v77 = vunpack.c.h.b16 %v28
  %v78 = vunpack.c.l.b16 %v29
  %v79 = vunpack.c.h.b16 %v29
  %v80 = vunpack.c.l.b16 %v30
  %v81 = vunpack.c.h.b16 %v30
  %v82 = vunpack.c.l.b16 %v31
  %v83 = vunpack.c.h.b16 %v31
  %v84 = vunpack.c.l.b16 %v32
  %v85 = vunpack.c.h.b16 %v32
  %v86 = vunpack.c.l.b16 %v33
  %v87 = vunpack.c.h.b16 %v33
  %v88 = vunpack.c.l.b16 %v34
  %v89 = vunpack.c.h.b16 %v34
  %v90 = vunpack.c.l.b16 %v35
  %v91 = vunpack.c.h.b16 %v35
  %v92 = vunpack.c.l.b16 %v36
  %v93 = vunpack.c.h.b16 %v36
  %v94 = vunpack.c.l.b16 %v37
  %v95 = vunpack.c.h.b16 %v37
  %v96 = vunpack.c.l.b16 %v38
  %v97 = vunpack.c.h.b16 %v38
  %v98 = vunpack.c.l.b16 %v39
  %v99 = vunpack.c.h.b16 %v39
  %v100 = vpack.c.b16 %v70, %v68
  %v101 = vpack.c.b16 %v71, %v69
  %v102 = vpack.c.b16 %v74, %v72
  %v103 = vpack.c.b16 %v75, %v73
  %v104 = vpack.c.b16 %v78, %v76
  %v105 = vpack.c.b16 %v79, %v77
  %v106 = vpack.c.b16 %v82, %v80
  %v107 = vpack.c.b16 %v83, %v81
  %v108 = vpack.c.b16 %v86, %v84
  %v109 = vpack.c.b16 %v87, %v85
  %v110 = vpack.c.b16 %v90, %v88
  %v111 = vpack.c.b16 %v91, %v89
  %v112 = vpack.c.b16 %v94, %v92
  %v113 = vpack.c.b16 %v95, %v93
  %v114 = vpack.c.b16 %v98, %v96
  %v115 = vpack.c.b16 %v99, %v97
  %132 = vmatprep.subr.bf16.mxu0 %v115
  %133 = vmatpush1.bf16.msra.mxu0 %v114
  %134 = vmatprep.subr.bf16.mxu0 %v113
  %135 = vmatpush1.bf16.msra.mxu0 %v112
  %136 = vmatprep.subr.bf16.mxu0 %v111
  %137 = vmatpush1.bf16.msra.mxu0 %v110
  %138 = vmatprep.subr.bf16.mxu0 %v109
  %139 = vmatpush1.bf16.msra.mxu0 %v108
  %140 = vmatprep.subr.bf16.mxu0 %v107
  %141 = vmatpush1.bf16.msra.mxu0 %v106
  %142 = vmatprep.subr.bf16.mxu0 %v105
  %143 = vmatpush1.bf16.msra.mxu0 %v104
  %144 = vmatprep.subr.bf16.mxu0 %v103
  %145 = vmatpush1.bf16.msra.mxu0 %v102
  %146 = vmatprep.subr.bf16.mxu0 %v101
  %147 = vmatpush1.bf16.msra.mxu0 %v100
  %148 = vmatprep.subr.bf16.mxu0 0
  %149 = vmatpush2.bf16.msra.mxu0 0
  %150 = vmatprep.subr.bf16.mxu0 0
  %151 = vmatpush2.bf16.msra.mxu0 0
  %152 = vmatprep.subr.bf16.mxu0 0
  %153 = vmatpush2.bf16.msra.mxu0 0
  %154 = vmatprep.subr.bf16.mxu0 0
  %155 = vmatpush2.bf16.msra.mxu0 0
  %156 = vmatprep.subr.bf16.mxu0 0
  %157 = vmatpush2.bf16.msra.mxu0 0
  %158 = vmatprep.subr.bf16.mxu0 0
  %159 = vmatpush2.bf16.msra.mxu0 0
  %160 = vmatprep.subr.bf16.mxu0 0
  %161 = vmatpush2.bf16.msra.mxu0 0
  %162 = vmatprep.subr.bf16.mxu0 0
  %163 = vmatpush2.bf16.msra.mxu0 0
  %164 = vmatprep.mubr.bf16.mxu0 0
  %165 = vmatmul.mubr.bf16.gmra.mxu0 %v23
  %v166 = vpop.f32.mrf.mxu0
  %v167 = vadd.f32 %v45, %v166
  %v168 = vpop.f32.mrf.mxu0
  %v169 = vadd.f32 %v49, %v168
  %v170 = vpop.f32.mrf.mxu0
  %v171 = vadd.f32 %v45, %v170
  %v172 = vpop.f32.mrf.mxu0
  %v173 = vadd.f32 %v49, %v172
  %174 = vdwg.mxu0
  %v175 = vmul.f32 %v167, 0.5
  %v176 = vmul.f32 %v169, 0.5
  %v177 = vmul.f32 %v171, 0.5
  %v178 = vmul.f32 %v173, 0.5
  %v179 = vmul.f32 %v167, 0.70710677
  %v180 = vmul.f32 %v169, 0.70710677
  %v181 = vmul.f32 %v171, 0.70710677
  %v182 = vmul.f32 %v173, 0.70710677
  %v183 = verf.f32.pop %v179
  %v184 = verf.f32.pop %v180
  %v185 = verf.f32.pop %v181
  %v186 = verf.f32.pop %v182
  %v187 = vadd.f32 %v183, 1.0
  %v188 = vadd.f32 %v184, 1.0
  %v189 = vadd.f32 %v185, 1.0
  %v190 = vadd.f32 %v186, 1.0
  %v191 = vmul.f32 %v175, %v187
  %v192 = vmul.f32 %v176, %v188
  %v193 = vmul.f32 %v177, %v189
  %v194 = vmul.f32 %v178, %v190
  %v195 = vpack.c.bf16 %v193, %v191
  %v196 = vpack.c.bf16 %v194, %v192
  %v197 = vld [vmem:[%s3] sm:$0xf]
  %v198 = vld [vmem:[%s3 + $0x4] sm:$0xf]
  %v199 = vld [vmem:[%s3 + $0x8] sm:$0xf]
  %v200 = vld [vmem:[%s3 + $0xc] sm:$0xf]
  %v201 = vld [vmem:[%s3 + $0x10] sm:$0xf]
  %v202 = vld [vmem:[%s3 + $0x14] sm:$0xf]
  %v203 = vld [vmem:[%s3 + $0x18] sm:$0xf]
  %v204 = vld [vmem:[%s3 + $0x1c] sm:$0xf]
  %v205 = vld [vmem:[%s3 + $0x20] sm:$0xf]
  %v206 = vld [vmem:[%s3 + $0x24] sm:$0xf]
  %v207 = vld [vmem:[%s3 + $0x28] sm:$0xf]
  %v208 = vld [vmem:[%s3 + $0x2c] sm:$0xf]
  %v209 = vld [vmem:[%s3 + $0x30] sm:$0xf]
  %v210 = vld [vmem:[%s3 + $0x34] sm:$0xf]
  %v211 = vld [vmem:[%s3 + $0x38] sm:$0xf]
  %v212 = vld [vmem:[%s3 + $0x3c] sm:$0xf]
  %v213 = vld [vmem:[%s3 + $0x40] sm:$0xf]
  %v214 = vld [vmem:[%s3 + $0x44] sm:$0xf]
  %v215 = vld [vmem:[%s3 + $0x48] sm:$0xf]
  %v216 = vld [vmem:[%s3 + $0x4c] sm:$0xf]
  %v217 = vld [vmem:[%s3 + $0x50] sm:$0xf]
  %v218 = vld [vmem:[%s3 + $0x54] sm:$0xf]
  %v219 = vld [vmem:[%s3 + $0x58] sm:$0xf]
  %v220 = vld [vmem:[%s3 + $0x5c] sm:$0xf]
  %v221 = vld [vmem:[%s3 + $0x60] sm:$0xf]
  %v222 = vld [vmem:[%s3 + $0x64] sm:$0xf]
  %v223 = vld [vmem:[%s3 + $0x68] sm:$0xf]
  %v224 = vld [vmem:[%s3 + $0x6c] sm:$0xf]
  %v225 = vld [vmem:[%s3 + $0x70] sm:$0xf]
  %v226 = vld [vmem:[%s3 + $0x74] sm:$0xf]
  %v227 = vld [vmem:[%s3 + $0x78] sm:$0xf]
  %v228 = vld [vmem:[%s3 + $0x7c] sm:$0xf]
  %v229 = vld [vmem:[%s4] sm:$0x1]
  %v231 = vlaneseq
  %v232 = vshrl.u32 %v231, 7
  %v233 = vsub.s32 0, %v232
  %v234 = vrot.slane %v229, %v233
  %v268 = vunpack.c.l.b16 %v197
  %v269 = vunpack.c.l.b16 %v198
  %v270 = vunpack.c.l.b16 %v199
  %v271 = vunpack.c.l.b16 %v200
  %v272 = vunpack.c.l.b16 %v201
  %v273 = vunpack.c.l.b16 %v202
  %v274 = vunpack.c.l.b16 %v203
  %v275 = vunpack.c.l.b16 %v204
  %v276 = vunpack.c.l.b16 %v205
  %v277 = vunpack.c.l.b16 %v206
  %v278 = vunpack.c.l.b16 %v207
  %v279 = vunpack.c.l.b16 %v208
  %v280 = vunpack.c.l.b16 %v209
  %v281 = vunpack.c.l.b16 %v210
  %v282 = vunpack.c.l.b16 %v211
  %v283 = vunpack.c.l.b16 %v212
  %v284 = vunpack.c.l.b16 %v213
  %v285 = vunpack.c.l.b16 %v214
  %v286 = vunpack.c.l.b16 %v215
  %v287 = vunpack.c.l.b16 %v216
  %v288 = vunpack.c.l.b16 %v217
  %v289 = vunpack.c.l.b16 %v218
  %v290 = vunpack.c.l.b16 %v219
  %v291 = vunpack.c.l.b16 %v220
  %v292 = vunpack.c.l.b16 %v221
  %v293 = vunpack.c.l.b16 %v222
  %v294 = vunpack.c.l.b16 %v223
  %v295 = vunpack.c.l.b16 %v224
  %v296 = vunpack.c.l.b16 %v225
  %v297 = vunpack.c.l.b16 %v226
  %v298 = vunpack.c.l.b16 %v227
  %v299 = vunpack.c.l.b16 %v228
  %v300 = vpack.c.b16 %v269, %v268
  %v301 = vpack.c.b16 %v271, %v270
  %v302 = vpack.c.b16 %v273, %v272
  %v303 = vpack.c.b16 %v275, %v274
  %v304 = vpack.c.b16 %v277, %v276
  %v305 = vpack.c.b16 %v279, %v278
  %v306 = vpack.c.b16 %v281, %v280
  %v307 = vpack.c.b16 %v283, %v282
  %v308 = vpack.c.b16 %v285, %v284
  %v309 = vpack.c.b16 %v287, %v286
  %v310 = vpack.c.b16 %v289, %v288
  %v311 = vpack.c.b16 %v291, %v290
  %v312 = vpack.c.b16 %v293, %v292
  %v313 = vpack.c.b16 %v295, %v294
  %v314 = vpack.c.b16 %v297, %v296
  %v315 = vpack.c.b16 %v299, %v298
  %332 = vmatprep.subr.bf16.mxu0 0
  %333 = vmatpush1.bf16.msra.mxu0 %v307
  %334 = vmatprep.subr.bf16.mxu0 0
  %335 = vmatpush1.bf16.msra.mxu0 %v306
  %336 = vmatprep.subr.bf16.mxu0 0
  %337 = vmatpush1.bf16.msra.mxu0 %v305
  %338 = vmatprep.subr.bf16.mxu0 0
  %339 = vmatpush1.bf16.msra.mxu0 %v304
  %340 = vmatprep.subr.bf16.mxu0 0
  %341 = vmatpush1.bf16.msra.mxu0 %v303
  %342 = vmatprep.subr.bf16.mxu0 0
  %343 = vmatpush1.bf16.msra.mxu0 %v302
  %344 = vmatprep.subr.bf16.mxu0 0
  %345 = vmatpush1.bf16.msra.mxu0 %v301
  %346 = vmatprep.subr.bf16.mxu0 0
  %347 = vmatpush1.bf16.msra.mxu0 %v300
  %348 = vmatprep.subr.bf16.mxu0 0
  %349 = vmatpush2.bf16.msra.mxu0 %v315
  %350 = vmatprep.subr.bf16.mxu0 0
  %351 = vmatpush2.bf16.msra.mxu0 %v314
  %352 = vmatprep.subr.bf16.mxu0 0
  %353 = vmatpush2.bf16.msra.mxu0 %v313
  %354 = vmatprep.subr.bf16.mxu0 0
  %355 = vmatpush2.bf16.msra.mxu0 %v312
  %356 = vmatprep.subr.bf16.mxu0 0
  %357 = vmatpush2.bf16.msra.mxu0 %v311
  %358 = vmatprep.subr.bf16.mxu0 0
  %359 = vmatpush2.bf16.msra.mxu0 %v310
  %360 = vmatprep.subr.bf16.mxu0 0
  %361 = vmatpush2.bf16.msra.mxu0 %v309
  %362 = vmatprep.subr.bf16.mxu0 0
  %363 = vmatpush2.bf16.msra.mxu0 %v308
  %364 = vmatprep.mubr.bf16.mxu0 %v196
  %365 = vmatmul.mubr.bf16.gmra.mxu0 %v195
  %v366 = vpop.f32.mrf.mxu0
  %v367 = vadd.f32 %v234, %v366
  %v368 = vpop.f32.mrf.mxu0
  %v369 = vpop.f32.mrf.mxu0
  %v370 = vadd.f32 %v234, %v369
  %v371 = vpop.f32.mrf.mxu0
  %372 = vdwg.mxu0
  %v373 = vadd.f32 %v367, %v21
  %v374 = vadd.f32 %v370, %v22
  %375 = vst [vmem:[%s5] sm:$0xff] %v373
  %376 = vst [vmem:[%s5 + $0x8] sm:$0xff] %v374
  // Predicated region
  $region22: #{channel_mixer_forward.1} parent=0 // pred_check
    _
  $region23: #{channel_mixer_forward.1} parent=0 // pred_check_branch
    %378 = sbr.rel (0) target = $region25
  $region24: #{channel_mixer_forward.1} parent=0 // pred_region
    _
  $region25: #{channel_mixer_forward.1} parent=0 // pred_fallthru
    _
  // Predicated region
  $region26: #{channel_mixer_forward.1} parent=0 // pred_check
    _
  $region27: #{channel_mixer_forward.1} parent=0 // pred_check_branch
    %380 = sbr.rel (0) target = $region29
  $region28: #{channel_mixer_forward.1} parent=0 // pred_region
    _
  $region29: #{channel_mixer_forward.1} parent=0 // pred_fallthru
    _

</llo_original>
